<compile_context>
chip_gen: v5e
topology: v5e:2x2
jax: 0.10.0
libtpu: 0.0.40
codegen_flags: <defaults>
</compile_context>

<pallas_src>
import functools

import numpy as np
import jax
import jax.numpy as jnp
from jax.experimental import pallas as pl
from jax.experimental.pallas import tpu as pltpu

LOG_STD_MAX = 2.0
LOG_STD_MIN = -5.0


def _actor_kernel(topk, n_experts, act_dim,
                  x_ref, w_ref, b_ref, we_ref, wr_ref, out_ref):
    x = x_ref[...].astype(jnp.float32)
    grp = 2 * act_dim

    # ---- single fused matmul + single bias add ------------------------------
    # lane layout: [gate logits (E) | expert0(mean|log_std) | expert1 | ... | 0-pad]
    fused = jnp.dot(x, w_ref[...], preferred_element_type=jnp.float32) + b_ref[...]

    # ---- gate: softmax over the leading E lanes (offset-0 slice) ------------
    logits = fused[:, :n_experts]
    lmax = jnp.max(logits, axis=-1, keepdims=True)
    ex = jnp.exp(logits - lmax)
    soft = ex * pl.reciprocal(jnp.sum(ex, axis=-1, keepdims=True), approx=False)

    # ---- top-k selection -> sparse gate (zeros elsewhere) -------------------
    iota = jax.lax.broadcasted_iota(jnp.int32, soft.shape, 1)  # hoisted once
    remaining = soft
    sparse = jnp.zeros_like(soft)
    for _ in range(topk):  # static unroll; topk is tiny
        cur_max = jnp.max(remaining, axis=-1, keepdims=True)
        is_max = remaining >= cur_max
        first_idx = jnp.min(jnp.where(is_max, iota, n_experts), axis=-1,
                            keepdims=True)
        pick = iota == first_idx
        sparse = jnp.where(pick, soft, sparse)
        remaining = jnp.where(pick, -jnp.inf, remaining)

    # ---- weighted expert sum via MXU expand / reduce (no lane slicing) ------
    # expand: (B, E) @ (E, Npad) 0/1 constant -> gate value broadcast onto each
    # expert's lane group (zeros on gate/pad lanes).
    gate_full = jnp.dot(sparse, we_ref[...], preferred_element_type=jnp.float32)
    gated = gate_full * fused                       # VPU, full lane width
    # reduce: (B, Npad) @ (Npad, 2*ACT) stacked-identity constant -> sum over
    # experts, back to the (mean | log_std) group.
    acc = jnp.dot(gated, wr_ref[...], preferred_element_type=jnp.float32)

    # ---- squash the log_std half of the lanes; mean half passes through -----
    squashed = LOG_STD_MIN + 0.5 * (LOG_STD_MAX - LOG_STD_MIN) * (jnp.tanh(acc) + 1.0)
    lane = jax.lax.broadcasted_iota(jnp.int32, acc.shape, 1)
    out_ref[...] = jnp.where(lane >= act_dim, squashed, acc)


def _round_up(v, m):
    return (v + m - 1) // m * m


def actor_forward(x, wg, bg, wm, bm, ws, bs, *, topk, tile_b=1024):
    """x:(B,OBS) f32; wg:(OBS,E); bg:(E,); wm/ws:(E,OBS,ACT); bm/bs:(E,ACT)."""
    n_experts, obs_dim, act_dim = wm.shape
    assert topk <= n_experts, "topk must be <= n_experts"
    B = x.shape[0]
    grp = 2 * act_dim
    n_used = n_experts + n_experts * grp
    n_pad = _round_up(max(n_used, 128), 128)        # lane-dense fused width

    # ---- pack fused weight/bias in the wrapper (done once, outside kernel) --
    # lane layout: [gate (E) | expert0(mean|log_std) | expert1 | ... | zero-pad]
    w_exp = jnp.concatenate([wm, ws], axis=-1)                       # (E,OBS,2A)
    w_exp = jnp.transpose(w_exp, (1, 0, 2)).reshape(obs_dim, n_experts * grp)
    w_fused = jnp.concatenate([wg, w_exp], axis=-1)                  # (OBS,n_used)
    w_fused = jnp.pad(w_fused, ((0, 0), (0, n_pad - n_used))).astype(jnp.float32)

    b_exp = jnp.concatenate([bm, bs], axis=-1).reshape(1, n_experts * grp)
    b_fused = jnp.concatenate([bg.reshape(1, n_experts), b_exp], axis=-1)
    b_fused = jnp.pad(b_fused, ((0, 0), (0, n_pad - n_used))).astype(jnp.float32)

    # ---- constant expand / reduce matrices (gate lanes & padding are zero) ---
    we_np = np.zeros((n_experts, n_pad), np.float32)
    wr_np = np.zeros((n_pad, grp), np.float32)
    eye_grp = np.eye(grp, dtype=np.float32)
    for e in range(n_experts):
        s = n_experts + e * grp
        we_np[e, s:s + grp] = 1.0
        wr_np[s:s + grp, :] = eye_grp
    w_expand = jnp.asarray(we_np)
    w_reduce = jnp.asarray(wr_np)

    # ---- batch tiling --------------------------------------------------------
    # Big tile to amortize per-step grid overhead, but cap at half the batch
    # (rounded to sublanes) so the "parallel" grid has >=2 steps for v7x's two
    # TensorCores whenever the batch allows it.
    tile_b = min(tile_b, _round_up(B, 8))
    tile_b = min(tile_b, max(8, _round_up(-(-B // 2), 8)))
    b_pad = _round_up(B, tile_b)
    x_f = x.astype(jnp.float32)
    if b_pad != B:
        x_f = jnp.pad(x_f, ((0, b_pad - B), (0, 0)))

    compiler_kwargs = dict(dimension_semantics=("parallel",))
    if tile_b > 2048:   # only needed near v5e's 16 MiB default scoped-VMEM limit
        compiler_kwargs["vmem_limit_bytes"] = 48 * 1024 * 1024

    kernel = functools.partial(_actor_kernel, topk, n_experts, act_dim)
    out = pl.pallas_call(
        kernel,
        out_shape=jax.ShapeDtypeStruct((b_pad, grp), jnp.float32),
        grid_spec=pltpu.PrefetchScalarGridSpec(
            num_scalar_prefetch=0,
            grid=(b_pad // tile_b,),
            in_specs=[
                pl.BlockSpec((tile_b, obs_dim), lambda i: (i, 0)),
                pl.BlockSpec((obs_dim, n_pad), lambda i: (0, 0)),
                pl.BlockSpec((1, n_pad), lambda i: (0, 0)),
                pl.BlockSpec((n_experts, n_pad), lambda i: (0, 0)),
                pl.BlockSpec((n_pad, grp), lambda i: (0, 0)),
            ],
            out_specs=pl.BlockSpec((tile_b, grp), lambda i: (i, 0)),
        ),
        compiler_params=pltpu.CompilerParams(**compiler_kwargs),
        cost_estimate=pl.CostEstimate(
            flops=2 * b_pad * (obs_dim * n_pad + n_experts * n_pad + n_pad * grp),
            transcendentals=b_pad * (n_experts + grp),
            bytes_accessed=4 * (b_pad * obs_dim + obs_dim * n_pad + n_pad
                                + n_experts * n_pad + n_pad * grp
                                + b_pad * grp),
        ),
    )(x_f, w_fused, b_fused, w_expand, w_reduce)

    out = out[:B]
    return out[:, :act_dim], out[:, act_dim:]


def actor_forward_ref(x, wg, bg, wm, bm, ws, bs, *, topk):
    """Pure-JAX reference of the same forward (training=False)."""
    logits = x @ wg + bg
    soft = jax.nn.softmax(logits, axis=-1)
    topv, topi = jax.lax.top_k(soft, topk)
    sparse = jnp.zeros_like(soft)
    sparse = jax.vmap(lambda s, i, v: s.at[i].set(v))(sparse, topi, topv)
    mean_all = jnp.einsum('bo,eoa->eba', x, wm) + bm[:, None, :]
    logstd_all = jnp.einsum('bo,eoa->eba', x, ws) + bs[:, None, :]
    g = jnp.transpose(sparse)[:, :, None]           # (E, B, 1)
    mean = jnp.sum(g * mean_all, axis=0)
    log_std = jnp.sum(g * logstd_all, axis=0)
    log_std = jnp.tanh(log_std)
    log_std = LOG_STD_MIN + 0.5 * (LOG_STD_MAX - LOG_STD_MIN) * (log_std + 1.0)
    return mean, log_std


if __name__ == "__main__":
    # Small shapes consistent with the module:
    B = 8            # batch
    OBS = 32         # np.prod(observation_space.shape)
    ACT = 8          # np.prod(action_space.shape)
    N_EXPERTS = 4    # cfg.sac.n_experts
    TOPK = 2         # cfg.sac.topk

    key = jax.random.PRNGKey(0)
    ks = jax.random.split(key, 8)

    x = jax.random.normal(ks[0], (B, OBS), dtype=jnp.float32)

    # Gate (TopkRouter.fc):   PyTorch Linear(OBS, N_EXPERTS) -> stored transposed.
    wg = jax.random.normal(ks[1], (OBS, N_EXPERTS), dtype=jnp.float32) * 0.1
    bg = jax.random.normal(ks[2], (N_EXPERTS,), dtype=jnp.float32) * 0.1

    # Expert heads: nn.Linear(OBS, ACT) x N_EXPERTS, stacked.
    wm = jax.random.normal(ks[3], (N_EXPERTS, OBS, ACT), dtype=jnp.float32) * 0.1
    bm = jax.random.normal(ks[4], (N_EXPERTS, ACT), dtype=jnp.float32) * 0.1
    ws = jax.random.normal(ks[5], (N_EXPERTS, OBS, ACT), dtype=jnp.float32) * 0.1
    bs = jax.random.normal(ks[6], (N_EXPERTS, ACT), dtype=jnp.float32) * 0.1

    mean, log_std = actor_forward(x, wg, bg, wm, bm, ws, bs, topk=TOPK)
    jax.block_until_ready((mean, log_std))

    mean_r, log_std_r = actor_forward_ref(x, wg, bg, wm, bm, ws, bs, topk=TOPK)
    assert jnp.allclose(mean, mean_r, atol=1e-4, rtol=1e-4), "mean mismatch"
    assert jnp.allclose(log_std, log_std_r, atol=1e-4, rtol=1e-4), "log_std mismatch"
    assert mean.shape == (B, ACT) and log_std.shape == (B, ACT)

    print("KERNEL_OK")
</pallas_src>

<mosaic_0001>
module attributes {stable_mosaic.version = 11 : i64} {
  func.func @_actor_kernel(%arg0: i32, %arg1: memref<8x32xf32, #tpu.memory_space<vmem>>, %arg2: memref<32x128xf32, #tpu.memory_space<vmem>>, %arg3: memref<1x128xf32, #tpu.memory_space<vmem>>, %arg4: memref<4x128xf32, #tpu.memory_space<vmem>>, %arg5: memref<128x16xf32, #tpu.memory_space<vmem>>, %arg6: memref<8x16xf32, #tpu.memory_space<vmem>>) attributes {dimension_semantics = [#tpu.dimension_semantics<parallel>], iteration_bounds = array<i64: 1>, scalar_prefetch = 0 : i64, scratch_operands = 0 : i64, tpu.core_type = #tpu.core_type<tc>, window_params = [{transform_indices = @transform_0, window_bounds = array<i64: 8, 32>}, {pipeline_mode = #tpu.pipeline_mode<synchronous>, transform_indices = @transform_1, window_bounds = array<i64: 32, 128>}, {pipeline_mode = #tpu.pipeline_mode<synchronous>, transform_indices = @transform_2, window_bounds = array<i64: 1, 128>}, {pipeline_mode = #tpu.pipeline_mode<synchronous>, transform_indices = @transform_3, window_bounds = array<i64: 4, 128>}, {pipeline_mode = #tpu.pipeline_mode<synchronous>, transform_indices = @transform_4, window_bounds = array<i64: 128, 16>}, {transform_indices = @transform_5, window_bounds = array<i64: 8, 16>}]} {
    %c0 = arith.constant 0 : index
    %c0_0 = arith.constant 0 : index
    %0 = vector.load %arg1[%c0, %c0_0] : memref<8x32xf32, #tpu.memory_space<vmem>>, vector<8x32xf32>
    %c0_1 = arith.constant 0 : index
    %c0_2 = arith.constant 0 : index
    %1 = vector.load %arg2[%c0_1, %c0_2] : memref<32x128xf32, #tpu.memory_space<vmem>>, vector<32x128xf32>
    %cst = arith.constant dense<0.000000e+00> : vector<8x128xf32>
    %2 = tpu.matmul %0, %1, %cst {dimension_numbers = #tpu.dot_dimension_numbers<[1], [0], [0], [1], [0, 0, 1, 1], [], []>} : vector<8x32xf32>, vector<32x128xf32>, vector<8x128xf32> -> vector<8x128xf32>
    %c0_3 = arith.constant 0 : index
    %c0_4 = arith.constant 0 : index
    %3 = vector.load %arg3[%c0_3, %c0_4] : memref<1x128xf32, #tpu.memory_space<vmem>>, vector<1x128xf32>
    %4 = vector.broadcast %3 : vector<1x128xf32> to vector<8x128xf32>
    %5 = arith.addf %2, %4 : vector<8x128xf32>
    %6 = vector.extract_strided_slice %5 {offsets = [0, 0], sizes = [8, 4], strides = [1, 1]} : vector<8x128xf32> to vector<8x4xf32>
    %cst_5 = arith.constant dense<0xFF800000> : vector<8xf32>
    %7 = vector.multi_reduction <maximumf>, %6, %cst_5 [1] : vector<8x4xf32> to vector<8xf32>
    %8 = vector.shape_cast %7 : vector<8xf32> to vector<8x1xf32>
    %9 = vector.broadcast %8 : vector<8x1xf32> to vector<8x4xf32>
    %10 = arith.subf %6, %9 : vector<8x4xf32>
    %11 = math.exp %10 : vector<8x4xf32>
    %cst_6 = arith.constant dense<0.000000e+00> : vector<8xf32>
    %12 = vector.multi_reduction <add>, %11, %cst_6 [1] : vector<8x4xf32> to vector<8xf32>
    %13 = vector.shape_cast %12 : vector<8xf32> to vector<8x1xf32>
    %14 = tpu.reciprocal %13 : vector<8x1xf32> -> vector<8x1xf32>
    %15 = vector.broadcast %14 : vector<8x1xf32> to vector<8x4xf32>
    %16 = arith.mulf %11, %15 : vector<8x4xf32>
    %17 = tpu.iota {dimensions = array<i32: 1>} : vector<8x4xi32>
    %cst_7 = arith.constant 0.000000e+00 : f32
    %18 = vector.broadcast %cst_7 : f32 to vector<8x4xf32>
    %cst_8 = arith.constant dense<0xFF800000> : vector<8xf32>
    %19 = vector.multi_reduction <maximumf>, %16, %cst_8 [1] : vector<8x4xf32> to vector<8xf32>
    %20 = vector.shape_cast %19 : vector<8xf32> to vector<8x1xf32>
    %21 = vector.broadcast %20 : vector<8x1xf32> to vector<8x4xf32>
    %22 = arith.cmpf oge, %16, %21 : vector<8x4xf32>
    %c4_i32 = arith.constant 4 : i32
    %23 = vector.broadcast %c4_i32 : i32 to vector<8x4xi32>
    %24 = arith.select %22, %17, %23 : vector<8x4xi1>, vector<8x4xi32>
    %cst_9 = arith.constant dense<2147483647> : vector<8xi32>
    %25 = vector.multi_reduction <minsi>, %24, %cst_9 [1] : vector<8x4xi32> to vector<8xi32>
    %26 = vector.shape_cast %25 : vector<8xi32> to vector<8x1xi32>
    %27 = vector.broadcast %26 : vector<8x1xi32> to vector<8x4xi32>
    %28 = arith.cmpi eq, %17, %27 : vector<8x4xi32>
    %29 = arith.select %28, %16, %18 : vector<8x4xi1>, vector<8x4xf32>
    %cst_10 = arith.constant 0xFF800000 : f32
    %30 = vector.broadcast %cst_10 : f32 to vector<8x4xf32>
    %31 = arith.select %28, %30, %16 : vector<8x4xi1>, vector<8x4xf32>
    %cst_11 = arith.constant dense<0xFF800000> : vector<8xf32>
    %32 = vector.multi_reduction <maximumf>, %31, %cst_11 [1] : vector<8x4xf32> to vector<8xf32>
    %33 = vector.shape_cast %32 : vector<8xf32> to vector<8x1xf32>
    %34 = vector.broadcast %33 : vector<8x1xf32> to vector<8x4xf32>
    %35 = arith.cmpf oge, %31, %34 : vector<8x4xf32>
    %c4_i32_12 = arith.constant 4 : i32
    %36 = vector.broadcast %c4_i32_12 : i32 to vector<8x4xi32>
    %37 = arith.select %35, %17, %36 : vector<8x4xi1>, vector<8x4xi32>
    %cst_13 = arith.constant dense<2147483647> : vector<8xi32>
    %38 = vector.multi_reduction <minsi>, %37, %cst_13 [1] : vector<8x4xi32> to vector<8xi32>
    %39 = vector.shape_cast %38 : vector<8xi32> to vector<8x1xi32>
    %40 = vector.broadcast %39 : vector<8x1xi32> to vector<8x4xi32>
    %41 = arith.cmpi eq, %17, %40 : vector<8x4xi32>
    %42 = arith.select %41, %16, %29 : vector<8x4xi1>, vector<8x4xf32>
    %c0_14 = arith.constant 0 : index
    %c0_15 = arith.constant 0 : index
    %43 = vector.load %arg4[%c0_14, %c0_15] : memref<4x128xf32, #tpu.memory_space<vmem>>, vector<4x128xf32>
    %cst_16 = arith.constant dense<0.000000e+00> : vector<8x128xf32>
    %44 = tpu.matmul %42, %43, %cst_16 {dimension_numbers = #tpu.dot_dimension_numbers<[1], [0], [0], [1], [0, 0, 1, 1], [], []>} : vector<8x4xf32>, vector<4x128xf32>, vector<8x128xf32> -> vector<8x128xf32>
    %45 = arith.mulf %44, %5 : vector<8x128xf32>
    %c0_17 = arith.constant 0 : index
    %c0_18 = arith.constant 0 : index
    %46 = vector.load %arg5[%c0_17, %c0_18] : memref<128x16xf32, #tpu.memory_space<vmem>>, vector<128x16xf32>
    %cst_19 = arith.constant dense<0.000000e+00> : vector<8x16xf32>
    %47 = tpu.matmul %45, %46, %cst_19 {dimension_numbers = #tpu.dot_dimension_numbers<[1], [0], [0], [1], [0, 0, 1, 1], [], []>} : vector<8x128xf32>, vector<128x16xf32>, vector<8x16xf32> -> vector<8x16xf32>
    %48 = math.tanh %47 : vector<8x16xf32>
    %cst_20 = arith.constant 1.000000e+00 : f32
    %49 = vector.broadcast %cst_20 : f32 to vector<8x16xf32>
    %50 = arith.addf %48, %49 : vector<8x16xf32>
    %cst_21 = arith.constant 3.500000e+00 : f32
    %51 = vector.broadcast %cst_21 : f32 to vector<8x16xf32>
    %52 = arith.mulf %51, %50 : vector<8x16xf32>
    %cst_22 = arith.constant -5.000000e+00 : f32
    %53 = vector.broadcast %cst_22 : f32 to vector<8x16xf32>
    %54 = arith.addf %53, %52 : vector<8x16xf32>
    %55 = tpu.iota {dimensions = array<i32: 1>} : vector<8x16xi32>
    %c8_i32 = arith.constant 8 : i32
    %56 = vector.broadcast %c8_i32 : i32 to vector<8x16xi32>
    %57 = arith.cmpi sge, %55, %56 : vector<8x16xi32>
    %58 = arith.select %57, %54, %47 : vector<8x16xi1>, vector<8x16xf32>
    %c0_23 = arith.constant 0 : index
    %c0_24 = arith.constant 0 : index
    %59 = vector.load %arg6[%c0_23, %c0_24] : memref<8x16xf32, #tpu.memory_space<vmem>>, vector<8x16xf32>
    tpu.vector_store %arg6[%c0_23, %c0_24], %58 {strides = array<i32>} : memref<8x16xf32, #tpu.memory_space<vmem>>, vector<8x16xf32>,
    return
  }
  func.func @transform_0(%arg0: i32) -> (i32, i32) {
    %c0_i32 = arith.constant 0 : i32
    %c0_i32_0 = arith.constant 0 : i32
    return %arg0, %c0_i32 : i32, i32
  }
  func.func @transform_1(%arg0: i32) -> (i32, i32) {
    %c0_i32 = arith.constant 0 : i32
    %c0_i32_0 = arith.constant 0 : i32
    %c0_i32_1 = arith.constant 0 : i32
    return %c0_i32, %c0_i32_0 : i32, i32
  }
  func.func @transform_2(%arg0: i32) -> (i32, i32) {
    %c0_i32 = arith.constant 0 : i32
    %c0_i32_0 = arith.constant 0 : i32
    %c0_i32_1 = arith.constant 0 : i32
    return %c0_i32, %c0_i32_0 : i32, i32
  }
  func.func @transform_3(%arg0: i32) -> (i32, i32) {
    %c0_i32 = arith.constant 0 : i32
    %c0_i32_0 = arith.constant 0 : i32
    %c0_i32_1 = arith.constant 0 : i32
    return %c0_i32, %c0_i32_0 : i32, i32
  }
  func.func @transform_4(%arg0: i32) -> (i32, i32) {
    %c0_i32 = arith.constant 0 : i32
    %c0_i32_0 = arith.constant 0 : i32
    %c0_i32_1 = arith.constant 0 : i32
    return %c0_i32, %c0_i32_0 : i32, i32
  }
  func.func @transform_5(%arg0: i32) -> (i32, i32) {
    %c0_i32 = arith.constant 0 : i32
    %c0_i32_0 = arith.constant 0 : i32
    return %arg0, %c0_i32 : i32, i32
  }
}

</mosaic_0001>

<llo_original>
// kernel: tpu_custom_call.1
$region0: #{tpu_custom_call.1}
  #allocation0 [shape = 'u32[]', space=smem, size = 0x4, offset = 0x4, fixed_abs, tag = 'smem constant byte address 0x4 - core index']
  #allocation1 [shape = 'u32[72,128]{1,0:T(1,128)}', space=vmem, size = 0x9000, scoped, tag = 'internal scratch']
  %s0 = inlined_call_operand.vmem [shape: f32[8,32], index: 0, kind: input, shape index: {}]
  %s1 = inlined_call_operand.vmem [shape: f32[32,128], index: 1, kind: input, shape index: {}]
  %s2 = inlined_call_operand.vmem [shape: f32[1,128], index: 2, kind: input, shape index: {}]
  %s3 = inlined_call_operand.vmem [shape: f32[4,128], index: 3, kind: input, shape index: {}]
  %s4 = inlined_call_operand.vmem [shape: f32[128,16], index: 4, kind: input, shape index: {}]
  %s5 = inlined_call_operand.hbm [shape: f32[8,16], index: 5, kind: output, shape index: {}]
  %s6 = sld [smem:[#allocation0]]
  $region30: #{tpu_custom_call.1} parent=0
    _
  %s8 = ssub.s32 1, %s6
  %s9 = scalar_select 0, %s8, %s6
  $region1: #{tpu_custom_call.1} parent=0
    #allocation2 [shape = 'u8[4096]{0}', space=vmem, size = 0x1000, scoped, tag = 'output window, operand 0, single buffered']
    #allocation3 [shape = 's32[1]{0}', space=sflag, size = 0x4, scoped, tag = 'scoped memory for tpu_custom_call.1']
    %10 = vsyncpa [#allocation3], 0
    // Predicated region
    $region2: #{tpu_custom_call.1} parent=1 // pred_check
      _
    $region3: #{tpu_custom_call.1} parent=1 // pred_check_branch
      %12 = sbr.rel (0) target = $region5
    $region4: #{tpu_custom_call.1} parent=1 // pred_region
      _
    $region5: #{tpu_custom_call.1} parent=1 // pred_fallthru
      _
    // Predicated region
    $region6: #{tpu_custom_call.1} parent=1 // pred_check
      _
    $region7: #{tpu_custom_call.1} parent=1 // pred_check_branch
      %14 = sbr.rel (0) target = $region9
    $region8: #{tpu_custom_call.1} parent=1 // pred_region
      _
    $region9: #{tpu_custom_call.1} parent=1 // pred_fallthru
      _
    // Predicated region
    $region10: #{tpu_custom_call.1} parent=1 // pred_check
      _
    $region11: #{tpu_custom_call.1} parent=1 // pred_check_branch
      %16 = sbr.rel (0) target = $region13
    $region12: #{tpu_custom_call.1} parent=1 // pred_region
      _
    $region13: #{tpu_custom_call.1} parent=1 // pred_fallthru
      _
    // Predicated region
    $region14: #{tpu_custom_call.1} parent=1 // pred_check
      _
    $region15: #{tpu_custom_call.1} parent=1 // pred_check_branch
      %18 = sbr.rel (0) target = $region17
    $region16: #{tpu_custom_call.1} parent=1 // pred_region
      _
    $region17: #{tpu_custom_call.1} parent=1 // pred_fallthru
      _
    // Predicated region
    $region18: #{tpu_custom_call.1} parent=1 // pred_check
      _
    $region19: #{tpu_custom_call.1} parent=1 // pred_check_branch
      %20 = sbr.rel (0) target = $region21
    $region20: #{tpu_custom_call.1} parent=1 // pred_region
      _
    $region21: #{tpu_custom_call.1} parent=1 // pred_fallthru
      _
    %v21 = vld [vmem:[%s0] sm:$0xff]
    %v22 = vld [vmem:[%s1] sm:$0xff]
    %v23 = vld [vmem:[%s1 + $0x8] sm:$0xff]
    %v24 = vld [vmem:[%s1 + $0x10] sm:$0xff]
    %v25 = vld [vmem:[%s1 + $0x18] sm:$0xff]
    %v26 = vld [vmem:[%s2] sm:$0x1]
    %v28 = vperm.slane %v26, 0
    %vm30 = vcmask 261120
    %v32 = vsel %vm30, %v21, 0
    %34 = vmatpush.msra.mxu0 0.0
    %35 = vmatpush.msra.mxu0 0.0
    %36 = vmatpush.msra.mxu0 0.0
    %37 = vmatpush.msra.mxu0 0.0
    %38 = vmatpush.msra.mxu0 0.0
    %39 = vmatpush.msra.mxu0 0.0
    %40 = vmatpush.msra.mxu0 0.0
    %41 = vmatpush.msra.mxu0 0.0
    %42 = vmatpush.msra.mxu0 0.0
    %43 = vmatpush.msra.mxu0 0.0
    %44 = vmatpush.msra.mxu0 0.0
    %45 = vmatpush.msra.mxu0 0.0
    %46 = vmatpush.msra.mxu0 %v25
    %47 = vmatpush.msra.mxu0 %v24
    %48 = vmatpush.msra.mxu0 %v23
    %49 = vmatpush.msra.mxu0 %v22
    %50 = vmatmul.f32.gmra.mxu0 %v32
    %v51 = vpop.f32.mrf.mxu0
    %v52 = vadd.f32 %v28, %v51
    %53 = vdwg.mxu0
    %vm54 = vcmask 31744
    %v55 = vsel %vm54, %v52, -inf
    %56 = vmax.xlane.f32.xlu0 %v55
    %v57 = vpop.xlane.xlu0 %56
    %v58 = vsub.f32 %v52, %v57
    %v59 = vmul.f32 %v58, 1.442695
    %v60 = vpow.pop %v59
    %v61 = vsel %vm54, %v60, 0.0
    %62 = vadd.xlane.f32.xlu0 %v61
    %v63 = vpop.xlane.xlu0 %62
    %v64 = vrcp.pop %v63
    %v65 = vmul.f32 %v63, %v64
    %v66 = vsub.f32 1.0, %v65
    %v67 = vmul.f32 %v64, %v66
    %v68 = vadd.f32 %v64, %v67
    %vm69 = vweird.f32 %v63
    %vm70 = vweird.f32 %v64
    %vm71 = vmor %vm69, %vm70
    %v72 = vsel %vm71, %v64, %v68
    %v73 = vand.u32 2147483647, %v63
    %vm74 = vcmp.eq.f32.partialorder %v73, 8.507059e+37
    %v75 = vand.u32 %v63, 2147483648
    %v76 = vor.u32 1.1754944e-38, %v75
    %v77 = vsel %vm74, %v76, %v72
    %v78 = vmul.f32 %v60, %v77
    %v79 = vlaneseq
    %v80 = vand.u32 %v79, 127
    %v81 = vsel %vm54, %v78, -inf
    %82 = vmax.xlane.f32.xlu0 %v81
    %v83 = vpop.xlane.xlu0 %82
    %vm84 = vcmp.ge.f32.partialorder %v78, %v83
    %v85 = vsel %vm84, %v80, 4
    %v86 = vsel %vm54, %v85, 2147483647
    %v87 = vand.u32 %v86, 65535
    %v88 = vshra.s32 %v86, 16
    %v89 = vcvt.s32.f32 %v87
    %v90 = vcvt.s32.f32 %v88
    %91 = vmin.xlane.f32.xlu0 %v90
    %v92 = vpop.xlane.xlu0 %91
    %vm93 = vcmp.eq.f32.partialorder %v90, %v92
    %v94 = vsel %vm93, %v89, inf
    %95 = vmin.xlane.f32.xlu0 %v94
    %v96 = vpop.xlane.xlu0 %95
    %v97 = vcvt.f32.s32 %v96
    %v98 = vcvt.f32.s32 %v92
    %v99 = vshll.u32 %v98, 16
    %v100 = vadd.s32 %v99, %v97
    %vm101 = vcmp.eq.s32.totalorder %v80, %v100
    %v102 = vsel %vm101, %v78, 0.0
    %v103 = vsel %vm101, -inf, %v78
    %v104 = vsel %vm54, %v103, -inf
    %105 = vmax.xlane.f32.xlu0 %v104
    %v106 = vpop.xlane.xlu0 %105
    %vm107 = vcmp.ge.f32.partialorder %v103, %v106
    %v108 = vsel %vm107, %v80, 4
    %v109 = vsel %vm54, %v108, 2147483647
    %v110 = vand.u32 %v109, 65535
    %v111 = vshra.s32 %v109, 16
    %v112 = vcvt.s32.f32 %v110
    %v113 = vcvt.s32.f32 %v111
    %114 = vmin.xlane.f32.xlu0 %v113
    %v115 = vpop.xlane.xlu0 %114
    %vm116 = vcmp.eq.f32.partialorder %v113, %v115
    %v117 = vsel %vm116, %v112, inf
    %118 = vmin.xlane.f32.xlu0 %v117
    %v119 = vpop.xlane.xlu0 %118
    %v120 = vcvt.f32.s32 %v119
    %v121 = vcvt.f32.s32 %v115
    %v122 = vshll.u32 %v121, 16
    %v123 = vadd.s32 %v122, %v120
    %vm124 = vcmp.eq.s32.totalorder %v80, %v123
    %v125 = vsel %vm124, %v78, %v102
    %v126 = vld [vmem:[%s3] sm:$0xf]
    %v128 = vsel %vm54, %v125, 0
    %vm130 = vcmask 1043456
    %v132 = vsel %vm130, %v126, 0
    %134 = vmatpush.msra.mxu0 0.0
    %135 = vmatpush.msra.mxu0 0.0
    %136 = vmatpush.msra.mxu0 0.0
    %137 = vmatpush.msra.mxu0 0.0
    %138 = vmatpush.msra.mxu0 0.0
    %139 = vmatpush.msra.mxu0 0.0
    %140 = vmatpush.msra.mxu0 0.0
    %141 = vmatpush.msra.mxu0 0.0
    %142 = vmatpush.msra.mxu0 0.0
    %143 = vmatpush.msra.mxu0 0.0
    %144 = vmatpush.msra.mxu0 0.0
    %145 = vmatpush.msra.mxu0 0.0
    %146 = vmatpush.msra.mxu0 0.0
    %147 = vmatpush.msra.mxu0 0.0
    %148 = vmatpush.msra.mxu0 0.0
    %149 = vmatpush.msra.mxu0 %v132
    %150 = vmatmul.f32.gmra.mxu0 %v128
    %v151 = vpop.f32.mrf.mxu0
    %v152 = vadd.f32 0.0, %v151
    %153 = vdwg.mxu0
    %v154 = vmul.f32 %v152, %v52
    %v155 = vld [vmem:[%s4] sm:$0xff]
    %v156 = vld [vmem:[%s4 + $0x8] sm:$0xff]
    %v157 = vld [vmem:[%s4 + $0x10] sm:$0xff]
    %v158 = vld [vmem:[%s4 + $0x18] sm:$0xff]
    %v159 = vld [vmem:[%s4 + $0x20] sm:$0xff]
    %v160 = vld [vmem:[%s4 + $0x28] sm:$0xff]
    %v161 = vld [vmem:[%s4 + $0x30] sm:$0xff]
    %v162 = vld [vmem:[%s4 + $0x38] sm:$0xff]
    %v163 = vld [vmem:[%s4 + $0x40] sm:$0xff]
    %v164 = vld [vmem:[%s4 + $0x48] sm:$0xff]
    %v165 = vld [vmem:[%s4 + $0x50] sm:$0xff]
    %v166 = vld [vmem:[%s4 + $0x58] sm:$0xff]
    %v167 = vld [vmem:[%s4 + $0x60] sm:$0xff]
    %v168 = vld [vmem:[%s4 + $0x68] sm:$0xff]
    %v169 = vld [vmem:[%s4 + $0x70] sm:$0xff]
    %v170 = vld [vmem:[%s4 + $0x78] sm:$0xff]
    %171 = vmatpush.msra.mxu0 %v170
    %172 = vmatpush.msra.mxu0 %v169
    %173 = vmatpush.msra.mxu0 %v168
    %174 = vmatpush.msra.mxu0 %v167
    %175 = vmatpush.msra.mxu0 %v166
    %176 = vmatpush.msra.mxu0 %v165
    %177 = vmatpush.msra.mxu0 %v164
    %178 = vmatpush.msra.mxu0 %v163
    %179 = vmatpush.msra.mxu0 %v162
    %180 = vmatpush.msra.mxu0 %v161
    %181 = vmatpush.msra.mxu0 %v160
    %182 = vmatpush.msra.mxu0 %v159
    %183 = vmatpush.msra.mxu0 %v158
    %184 = vmatpush.msra.mxu0 %v157
    %185 = vmatpush.msra.mxu0 %v156
    %186 = vmatpush.msra.mxu0 %v155
    %187 = vmatmul.f32.gmra.mxu0 %v154
    %v188 = vpop.f32.mrf.mxu0
    %v189 = vadd.f32 0.0, %v188
    %190 = vdwg.mxu0
    %v191 = vtanh.pop %v189
    %v192 = vadd.f32 %v191, 1.0
    %v193 = vmul.f32 %v192, 3.5
    %v194 = vadd.f32 %v193, -5.0
    %vm195 = vcmp.ge.s32.totalorder %v80, 8
    %v196 = vsel %vm195, %v194, %v189
    %vm197 = vcmask 130048
    %198 = vst.msk [vmem:[#allocation2] sm:$0xff] %vm197, %v196
    // Predicated region
    $region22: #{tpu_custom_call.1} parent=1 // pred_check
      _
    $region23: #{tpu_custom_call.1} parent=1 // pred_check_branch
      %200 = sbr.rel (0) target = $region25
    $region24: #{tpu_custom_call.1} parent=1 // pred_region
      %202 = vsyncadd [#allocation3], 0
      %s204 = sshll.u32 [#allocation2], 4
      %s205 = int_to_ptr.vmem [resolvable:$true] %s204
      %s206 = sshll.u32 %s5, 4
      %s207 = int_to_ptr.hbm [resolvable:$true] %s206
      %209 = dma.vmem_to_hbm [thread:$0]  %s205, 128, %s207, [#allocation3]
    $region25: #{tpu_custom_call.1} parent=1 // pred_fallthru
      _
    // Predicated region
    $region26: #{tpu_custom_call.1} parent=1 // pred_check
      _
    $region27: #{tpu_custom_call.1} parent=1 // pred_check_branch
      %211 = sbr.rel (0) target = $region29
    $region28: #{tpu_custom_call.1} parent=1 // pred_region
      %213 = dma.done [#allocation3], 128
    $region29: #{tpu_custom_call.1} parent=1 // pred_fallthru
      _
    %214 = vsyncpa [#allocation3], 1

</llo_original>
